<compile_context>
chip_gen: v5e
topology: v5e:2x2
jax: 0.10.0
libtpu: 0.0.40
codegen_flags: <defaults>
</compile_context>

<pallas_src>
import jax
import jax.numpy as jnp
from jax.experimental import pallas as pl
from jax.experimental.pallas import tpu as pltpu

HIDDEN_SIZE = 6
INPUT_SIZE = 2
NUM_CLASSES = 2
NUM_LAYERS = 1  # kernel implements the single-layer case (num_layers == 1)


def lstm_kernel(gx_ref, w_hh_ref, w_fc_ref, b_fc_ref, out_ref):
    """gx_ref:   (T, B, 4H)  precomputed x_t @ W_ih^T + (b_ih + b_hh), gate order [i,f,o,g]
       w_hh_ref: (H, 4H)     recurrent weight, transposed, same gate order
       w_fc_ref: (H, C)      final FC weight, transposed
       b_fc_ref: (1, C)      final FC bias
       out_ref:  (B, C)"""
    T, B, _ = gx_ref.shape
    H = w_hh_ref.shape[0]

    w_hh = w_hh_ref[...]                      # load once; stays resident across the loop
    h = jnp.zeros((B, H), jnp.float32)
    c = jnp.zeros((B, H), jnp.float32)

    # T is static and small -> fully unrolled straight-line code; only the recurrent
    # matmul + gate math sit on the serial dependency chain each step.
    for t in range(T):
        gates = gx_ref[t] + jnp.dot(h, w_hh, preferred_element_type=jnp.float32)
        sig = jax.nn.sigmoid(gates[:, :3 * H])     # [i | f | o] in one contiguous slice
        g_g = jnp.tanh(gates[:, 3 * H:])           # [g]
        i_g = sig[:, 0:H]
        f_g = sig[:, H:2 * H]
        o_g = sig[:, 2 * H:3 * H]
        c = f_g * c + i_g * g_g
        h = o_g * jnp.tanh(c)

    # Final FC on the last hidden state: out = h_T @ W_fc^T + b_fc
    out_ref[...] = (jnp.dot(h, w_fc_ref[...], preferred_element_type=jnp.float32)
                    + b_fc_ref[...])


def _reorder_gates(w, H):
    """Permute the leading 4H axis from PyTorch order [i, f, g, o] to [i, f, o, g]."""
    i, f, g, o = w[0:H], w[H:2 * H], w[2 * H:3 * H], w[3 * H:4 * H]
    return jnp.concatenate([i, f, o, g], axis=0)


def lstm_forward(x, params):
    """x: (B, T, input_size) float32 (batch_first, like the PyTorch module).
       returns: (B, num_classes) float32."""
    B, T, I = x.shape
    H = HIDDEN_SIZE
    C = NUM_CLASSES

    # Wrapper-side (free) weight prep: gate reorder + transposes.
    w_ih_r = _reorder_gates(params["w_ih"], H)                  # (4H, I) [i,f,o,g]
    w_hh_r = _reorder_gates(params["w_hh"], H)                  # (4H, H)
    b_r = _reorder_gates(params["b_ih"] + params["b_hh"], H)    # (4H,)

    # Hoisted time-parallel input projection, emitted directly in time-major layout
    # (single fused XLA op: dot + transpose + bias add).
    gx = (jnp.einsum("bti,gi->tbg", x, w_ih_r)
          + b_r[None, None, :]).astype(jnp.float32)             # (T, B, 4H)

    w_hh_t = w_hh_r.T                                           # (H, 4H)
    w_fc_t = params["w_fc"].T                                   # (H, C)
    b_fc = params["b_fc"][None, :]                              # (1, C)

    vmem = pl.BlockSpec(memory_space=pltpu.MemorySpace.VMEM)    # whole-array VMEM blocks
    out = pl.pallas_call(
        lstm_kernel,
        out_shape=jax.ShapeDtypeStruct((B, C), jnp.float32),
        in_specs=[vmem, vmem, vmem, vmem],
        out_specs=vmem,
    )(gx, w_hh_t, w_fc_t, b_fc)
    return out


def init_params(key):
    """Deterministic init matching nn.LSTM / nn.Linear shapes (uniform(-k, k), k=1/sqrt(H))."""
    H, I, C = HIDDEN_SIZE, INPUT_SIZE, NUM_CLASSES
    k = 1.0 / jnp.sqrt(jnp.float32(H))
    ks = jax.random.split(key, 6)
    u = lambda kk, shape: jax.random.uniform(kk, shape, jnp.float32, -k, k)
    return {
        "w_ih": u(ks[0], (4 * H, I)),
        "w_hh": u(ks[1], (4 * H, H)),
        "b_ih": u(ks[2], (4 * H,)),
        "b_hh": u(ks[3], (4 * H,)),
        "w_fc": u(ks[4], (C, H)),
        "b_fc": u(ks[5], (C,)),
    }


def lstm_forward_ref(x, params):
    """Pure-JAX reference (PyTorch semantics) for correctness checking."""
    B, T, I = x.shape
    H = HIDDEN_SIZE
    w_ih, w_hh = params["w_ih"], params["w_hh"]
    b = params["b_ih"] + params["b_hh"]

    def step(carry, x_t):
        h, c = carry
        gates = x_t @ w_ih.T + h @ w_hh.T + b
        i_g = jax.nn.sigmoid(gates[:, 0:H])
        f_g = jax.nn.sigmoid(gates[:, H:2 * H])
        g_g = jnp.tanh(gates[:, 2 * H:3 * H])
        o_g = jax.nn.sigmoid(gates[:, 3 * H:4 * H])
        c = f_g * c + i_g * g_g
        h = o_g * jnp.tanh(c)
        return (h, c), None

    h0 = jnp.zeros((B, H), jnp.float32)
    c0 = jnp.zeros((B, H), jnp.float32)
    (h_T, _), _ = jax.lax.scan(step, (h0, c0), jnp.transpose(x, (1, 0, 2)))
    return h_T @ params["w_fc"].T + params["b_fc"]


if __name__ == "__main__":
    key = jax.random.PRNGKey(0)
    k_param, k_x = jax.random.split(key)

    params = init_params(k_param)
    B, T = 2, 8
    x = jax.random.normal(k_x, (B, T, INPUT_SIZE), jnp.float32)

    out = lstm_forward(x, params)
    out = jax.block_until_ready(out)

    ref = lstm_forward_ref(x, params)
    assert out.shape == (B, NUM_CLASSES)
    assert jnp.allclose(out, ref, atol=1e-5, rtol=1e-5), (out, ref)

    print("KERNEL_OK")
</pallas_src>

<mosaic_0001>
module attributes {stable_mosaic.version = 11 : i64} {
  func.func @lstm_kernel(%arg0: memref<8x2x24xf32, #tpu.memory_space<vmem>>, %arg1: memref<6x24xf32, #tpu.memory_space<vmem>>, %arg2: memref<6x2xf32, #tpu.memory_space<vmem>>, %arg3: memref<1x2xf32, #tpu.memory_space<vmem>>, %arg4: memref<2x2xf32, #tpu.memory_space<vmem>>) attributes {dimension_semantics = [], scalar_prefetch = 0 : i64, scratch_operands = 0 : i64, tpu.core_type = #tpu.core_type<tc>} {
    %c0 = arith.constant 0 : index
    %c0_0 = arith.constant 0 : index
    %0 = vector.load %arg1[%c0, %c0_0] : memref<6x24xf32, #tpu.memory_space<vmem>>, vector<6x24xf32>
    %cst = arith.constant 0.000000e+00 : f32
    %1 = vector.broadcast %cst : f32 to vector<2x6xf32>
    %cst_1 = arith.constant 0.000000e+00 : f32
    %2 = vector.broadcast %cst_1 : f32 to vector<2x6xf32>
    %c0_2 = arith.constant 0 : index
    %c0_3 = arith.constant 0 : index
    %c0_4 = arith.constant 0 : index
    %3 = vector.load %arg0[%c0_2, %c0_3, %c0_4] : memref<8x2x24xf32, #tpu.memory_space<vmem>>, vector<1x2x24xf32>
    %4 = vector.shape_cast %3 : vector<1x2x24xf32> to vector<2x24xf32>
    %cst_5 = arith.constant dense<0.000000e+00> : vector<2x24xf32>
    %5 = tpu.matmul %1, %0, %cst_5 {dimension_numbers = #tpu.dot_dimension_numbers<[1], [0], [0], [1], [0, 0, 1, 1], [], []>} : vector<2x6xf32>, vector<6x24xf32>, vector<2x24xf32> -> vector<2x24xf32>
    %6 = arith.addf %4, %5 : vector<2x24xf32>
    %7 = vector.extract_strided_slice %6 {offsets = [0, 0], sizes = [2, 18], strides = [1, 1]} : vector<2x24xf32> to vector<2x18xf32>
    %8 = arith.negf %7 : vector<2x18xf32>
    %9 = math.exp %8 : vector<2x18xf32>
    %cst_6 = arith.constant 1.000000e+00 : f32
    %10 = vector.broadcast %cst_6 : f32 to vector<2x18xf32>
    %11 = arith.addf %10, %9 : vector<2x18xf32>
    %12 = arith.divf %10, %11 : vector<2x18xf32>
    %13 = vector.extract_strided_slice %6 {offsets = [0, 18], sizes = [2, 6], strides = [1, 1]} : vector<2x24xf32> to vector<2x6xf32>
    %14 = math.tanh %13 : vector<2x6xf32>
    %15 = vector.extract_strided_slice %12 {offsets = [0, 0], sizes = [2, 6], strides = [1, 1]} : vector<2x18xf32> to vector<2x6xf32>
    %16 = vector.extract_strided_slice %12 {offsets = [0, 6], sizes = [2, 6], strides = [1, 1]} : vector<2x18xf32> to vector<2x6xf32>
    %17 = vector.extract_strided_slice %12 {offsets = [0, 12], sizes = [2, 6], strides = [1, 1]} : vector<2x18xf32> to vector<2x6xf32>
    %18 = arith.mulf %16, %2 : vector<2x6xf32>
    %19 = arith.mulf %15, %14 : vector<2x6xf32>
    %20 = arith.addf %18, %19 : vector<2x6xf32>
    %21 = math.tanh %20 : vector<2x6xf32>
    %22 = arith.mulf %17, %21 : vector<2x6xf32>
    %c1 = arith.constant 1 : index
    %c0_7 = arith.constant 0 : index
    %c0_8 = arith.constant 0 : index
    %23 = vector.load %arg0[%c1, %c0_7, %c0_8] : memref<8x2x24xf32, #tpu.memory_space<vmem>>, vector<1x2x24xf32>
    %24 = vector.shape_cast %23 : vector<1x2x24xf32> to vector<2x24xf32>
    %cst_9 = arith.constant dense<0.000000e+00> : vector<2x24xf32>
    %25 = tpu.matmul %22, %0, %cst_9 {dimension_numbers = #tpu.dot_dimension_numbers<[1], [0], [0], [1], [0, 0, 1, 1], [], []>} : vector<2x6xf32>, vector<6x24xf32>, vector<2x24xf32> -> vector<2x24xf32>
    %26 = arith.addf %24, %25 : vector<2x24xf32>
    %27 = vector.extract_strided_slice %26 {offsets = [0, 0], sizes = [2, 18], strides = [1, 1]} : vector<2x24xf32> to vector<2x18xf32>
    %28 = arith.negf %27 : vector<2x18xf32>
    %29 = math.exp %28 : vector<2x18xf32>
    %cst_10 = arith.constant 1.000000e+00 : f32
    %30 = vector.broadcast %cst_10 : f32 to vector<2x18xf32>
    %31 = arith.addf %30, %29 : vector<2x18xf32>
    %32 = arith.divf %30, %31 : vector<2x18xf32>
    %33 = vector.extract_strided_slice %26 {offsets = [0, 18], sizes = [2, 6], strides = [1, 1]} : vector<2x24xf32> to vector<2x6xf32>
    %34 = math.tanh %33 : vector<2x6xf32>
    %35 = vector.extract_strided_slice %32 {offsets = [0, 0], sizes = [2, 6], strides = [1, 1]} : vector<2x18xf32> to vector<2x6xf32>
    %36 = vector.extract_strided_slice %32 {offsets = [0, 6], sizes = [2, 6], strides = [1, 1]} : vector<2x18xf32> to vector<2x6xf32>
    %37 = vector.extract_strided_slice %32 {offsets = [0, 12], sizes = [2, 6], strides = [1, 1]} : vector<2x18xf32> to vector<2x6xf32>
    %38 = arith.mulf %36, %20 : vector<2x6xf32>
    %39 = arith.mulf %35, %34 : vector<2x6xf32>
    %40 = arith.addf %38, %39 : vector<2x6xf32>
    %41 = math.tanh %40 : vector<2x6xf32>
    %42 = arith.mulf %37, %41 : vector<2x6xf32>
    %c2 = arith.constant 2 : index
    %c0_11 = arith.constant 0 : index
    %c0_12 = arith.constant 0 : index
    %43 = vector.load %arg0[%c2, %c0_11, %c0_12] : memref<8x2x24xf32, #tpu.memory_space<vmem>>, vector<1x2x24xf32>
    %44 = vector.shape_cast %43 : vector<1x2x24xf32> to vector<2x24xf32>
    %cst_13 = arith.constant dense<0.000000e+00> : vector<2x24xf32>
    %45 = tpu.matmul %42, %0, %cst_13 {dimension_numbers = #tpu.dot_dimension_numbers<[1], [0], [0], [1], [0, 0, 1, 1], [], []>} : vector<2x6xf32>, vector<6x24xf32>, vector<2x24xf32> -> vector<2x24xf32>
    %46 = arith.addf %44, %45 : vector<2x24xf32>
    %47 = vector.extract_strided_slice %46 {offsets = [0, 0], sizes = [2, 18], strides = [1, 1]} : vector<2x24xf32> to vector<2x18xf32>
    %48 = arith.negf %47 : vector<2x18xf32>
    %49 = math.exp %48 : vector<2x18xf32>
    %cst_14 = arith.constant 1.000000e+00 : f32
    %50 = vector.broadcast %cst_14 : f32 to vector<2x18xf32>
    %51 = arith.addf %50, %49 : vector<2x18xf32>
    %52 = arith.divf %50, %51 : vector<2x18xf32>
    %53 = vector.extract_strided_slice %46 {offsets = [0, 18], sizes = [2, 6], strides = [1, 1]} : vector<2x24xf32> to vector<2x6xf32>
    %54 = math.tanh %53 : vector<2x6xf32>
    %55 = vector.extract_strided_slice %52 {offsets = [0, 0], sizes = [2, 6], strides = [1, 1]} : vector<2x18xf32> to vector<2x6xf32>
    %56 = vector.extract_strided_slice %52 {offsets = [0, 6], sizes = [2, 6], strides = [1, 1]} : vector<2x18xf32> to vector<2x6xf32>
    %57 = vector.extract_strided_slice %52 {offsets = [0, 12], sizes = [2, 6], strides = [1, 1]} : vector<2x18xf32> to vector<2x6xf32>
    %58 = arith.mulf %56, %40 : vector<2x6xf32>
    %59 = arith.mulf %55, %54 : vector<2x6xf32>
    %60 = arith.addf %58, %59 : vector<2x6xf32>
    %61 = math.tanh %60 : vector<2x6xf32>
    %62 = arith.mulf %57, %61 : vector<2x6xf32>
    %c3 = arith.constant 3 : index
    %c0_15 = arith.constant 0 : index
    %c0_16 = arith.constant 0 : index
    %63 = vector.load %arg0[%c3, %c0_15, %c0_16] : memref<8x2x24xf32, #tpu.memory_space<vmem>>, vector<1x2x24xf32>
    %64 = vector.shape_cast %63 : vector<1x2x24xf32> to vector<2x24xf32>
    %cst_17 = arith.constant dense<0.000000e+00> : vector<2x24xf32>
    %65 = tpu.matmul %62, %0, %cst_17 {dimension_numbers = #tpu.dot_dimension_numbers<[1], [0], [0], [1], [0, 0, 1, 1], [], []>} : vector<2x6xf32>, vector<6x24xf32>, vector<2x24xf32> -> vector<2x24xf32>
    %66 = arith.addf %64, %65 : vector<2x24xf32>
    %67 = vector.extract_strided_slice %66 {offsets = [0, 0], sizes = [2, 18], strides = [1, 1]} : vector<2x24xf32> to vector<2x18xf32>
    %68 = arith.negf %67 : vector<2x18xf32>
    %69 = math.exp %68 : vector<2x18xf32>
    %cst_18 = arith.constant 1.000000e+00 : f32
    %70 = vector.broadcast %cst_18 : f32 to vector<2x18xf32>
    %71 = arith.addf %70, %69 : vector<2x18xf32>
    %72 = arith.divf %70, %71 : vector<2x18xf32>
    %73 = vector.extract_strided_slice %66 {offsets = [0, 18], sizes = [2, 6], strides = [1, 1]} : vector<2x24xf32> to vector<2x6xf32>
    %74 = math.tanh %73 : vector<2x6xf32>
    %75 = vector.extract_strided_slice %72 {offsets = [0, 0], sizes = [2, 6], strides = [1, 1]} : vector<2x18xf32> to vector<2x6xf32>
    %76 = vector.extract_strided_slice %72 {offsets = [0, 6], sizes = [2, 6], strides = [1, 1]} : vector<2x18xf32> to vector<2x6xf32>
    %77 = vector.extract_strided_slice %72 {offsets = [0, 12], sizes = [2, 6], strides = [1, 1]} : vector<2x18xf32> to vector<2x6xf32>
    %78 = arith.mulf %76, %60 : vector<2x6xf32>
    %79 = arith.mulf %75, %74 : vector<2x6xf32>
    %80 = arith.addf %78, %79 : vector<2x6xf32>
    %81 = math.tanh %80 : vector<2x6xf32>
    %82 = arith.mulf %77, %81 : vector<2x6xf32>
    %c4 = arith.constant 4 : index
    %c0_19 = arith.constant 0 : index
    %c0_20 = arith.constant 0 : index
    %83 = vector.load %arg0[%c4, %c0_19, %c0_20] : memref<8x2x24xf32, #tpu.memory_space<vmem>>, vector<1x2x24xf32>
    %84 = vector.shape_cast %83 : vector<1x2x24xf32> to vector<2x24xf32>
    %cst_21 = arith.constant dense<0.000000e+00> : vector<2x24xf32>
    %85 = tpu.matmul %82, %0, %cst_21 {dimension_numbers = #tpu.dot_dimension_numbers<[1], [0], [0], [1], [0, 0, 1, 1], [], []>} : vector<2x6xf32>, vector<6x24xf32>, vector<2x24xf32> -> vector<2x24xf32>
    %86 = arith.addf %84, %85 : vector<2x24xf32>
    %87 = vector.extract_strided_slice %86 {offsets = [0, 0], sizes = [2, 18], strides = [1, 1]} : vector<2x24xf32> to vector<2x18xf32>
    %88 = arith.negf %87 : vector<2x18xf32>
    %89 = math.exp %88 : vector<2x18xf32>
    %cst_22 = arith.constant 1.000000e+00 : f32
    %90 = vector.broadcast %cst_22 : f32 to vector<2x18xf32>
    %91 = arith.addf %90, %89 : vector<2x18xf32>
    %92 = arith.divf %90, %91 : vector<2x18xf32>
    %93 = vector.extract_strided_slice %86 {offsets = [0, 18], sizes = [2, 6], strides = [1, 1]} : vector<2x24xf32> to vector<2x6xf32>
    %94 = math.tanh %93 : vector<2x6xf32>
    %95 = vector.extract_strided_slice %92 {offsets = [0, 0], sizes = [2, 6], strides = [1, 1]} : vector<2x18xf32> to vector<2x6xf32>
    %96 = vector.extract_strided_slice %92 {offsets = [0, 6], sizes = [2, 6], strides = [1, 1]} : vector<2x18xf32> to vector<2x6xf32>
    %97 = vector.extract_strided_slice %92 {offsets = [0, 12], sizes = [2, 6], strides = [1, 1]} : vector<2x18xf32> to vector<2x6xf32>
    %98 = arith.mulf %96, %80 : vector<2x6xf32>
    %99 = arith.mulf %95, %94 : vector<2x6xf32>
    %100 = arith.addf %98, %99 : vector<2x6xf32>
    %101 = math.tanh %100 : vector<2x6xf32>
    %102 = arith.mulf %97, %101 : vector<2x6xf32>
    %c5 = arith.constant 5 : index
    %c0_23 = arith.constant 0 : index
    %c0_24 = arith.constant 0 : index
    %103 = vector.load %arg0[%c5, %c0_23, %c0_24] : memref<8x2x24xf32, #tpu.memory_space<vmem>>, vector<1x2x24xf32>
    %104 = vector.shape_cast %103 : vector<1x2x24xf32> to vector<2x24xf32>
    %cst_25 = arith.constant dense<0.000000e+00> : vector<2x24xf32>
    %105 = tpu.matmul %102, %0, %cst_25 {dimension_numbers = #tpu.dot_dimension_numbers<[1], [0], [0], [1], [0, 0, 1, 1], [], []>} : vector<2x6xf32>, vector<6x24xf32>, vector<2x24xf32> -> vector<2x24xf32>
    %106 = arith.addf %104, %105 : vector<2x24xf32>
    %107 = vector.extract_strided_slice %106 {offsets = [0, 0], sizes = [2, 18], strides = [1, 1]} : vector<2x24xf32> to vector<2x18xf32>
    %108 = arith.negf %107 : vector<2x18xf32>
    %109 = math.exp %108 : vector<2x18xf32>
    %cst_26 = arith.constant 1.000000e+00 : f32
    %110 = vector.broadcast %cst_26 : f32 to vector<2x18xf32>
    %111 = arith.addf %110, %109 : vector<2x18xf32>
    %112 = arith.divf %110, %111 : vector<2x18xf32>
    %113 = vector.extract_strided_slice %106 {offsets = [0, 18], sizes = [2, 6], strides = [1, 1]} : vector<2x24xf32> to vector<2x6xf32>
    %114 = math.tanh %113 : vector<2x6xf32>
    %115 = vector.extract_strided_slice %112 {offsets = [0, 0], sizes = [2, 6], strides = [1, 1]} : vector<2x18xf32> to vector<2x6xf32>
    %116 = vector.extract_strided_slice %112 {offsets = [0, 6], sizes = [2, 6], strides = [1, 1]} : vector<2x18xf32> to vector<2x6xf32>
    %117 = vector.extract_strided_slice %112 {offsets = [0, 12], sizes = [2, 6], strides = [1, 1]} : vector<2x18xf32> to vector<2x6xf32>
    %118 = arith.mulf %116, %100 : vector<2x6xf32>
    %119 = arith.mulf %115, %114 : vector<2x6xf32>
    %120 = arith.addf %118, %119 : vector<2x6xf32>
    %121 = math.tanh %120 : vector<2x6xf32>
    %122 = arith.mulf %117, %121 : vector<2x6xf32>
    %c6 = arith.constant 6 : index
    %c0_27 = arith.constant 0 : index
    %c0_28 = arith.constant 0 : index
    %123 = vector.load %arg0[%c6, %c0_27, %c0_28] : memref<8x2x24xf32, #tpu.memory_space<vmem>>, vector<1x2x24xf32>
    %124 = vector.shape_cast %123 : vector<1x2x24xf32> to vector<2x24xf32>
    %cst_29 = arith.constant dense<0.000000e+00> : vector<2x24xf32>
    %125 = tpu.matmul %122, %0, %cst_29 {dimension_numbers = #tpu.dot_dimension_numbers<[1], [0], [0], [1], [0, 0, 1, 1], [], []>} : vector<2x6xf32>, vector<6x24xf32>, vector<2x24xf32> -> vector<2x24xf32>
    %126 = arith.addf %124, %125 : vector<2x24xf32>
    %127 = vector.extract_strided_slice %126 {offsets = [0, 0], sizes = [2, 18], strides = [1, 1]} : vector<2x24xf32> to vector<2x18xf32>
    %128 = arith.negf %127 : vector<2x18xf32>
    %129 = math.exp %128 : vector<2x18xf32>
    %cst_30 = arith.constant 1.000000e+00 : f32
    %130 = vector.broadcast %cst_30 : f32 to vector<2x18xf32>
    %131 = arith.addf %130, %129 : vector<2x18xf32>
    %132 = arith.divf %130, %131 : vector<2x18xf32>
    %133 = vector.extract_strided_slice %126 {offsets = [0, 18], sizes = [2, 6], strides = [1, 1]} : vector<2x24xf32> to vector<2x6xf32>
    %134 = math.tanh %133 : vector<2x6xf32>
    %135 = vector.extract_strided_slice %132 {offsets = [0, 0], sizes = [2, 6], strides = [1, 1]} : vector<2x18xf32> to vector<2x6xf32>
    %136 = vector.extract_strided_slice %132 {offsets = [0, 6], sizes = [2, 6], strides = [1, 1]} : vector<2x18xf32> to vector<2x6xf32>
    %137 = vector.extract_strided_slice %132 {offsets = [0, 12], sizes = [2, 6], strides = [1, 1]} : vector<2x18xf32> to vector<2x6xf32>
    %138 = arith.mulf %136, %120 : vector<2x6xf32>
    %139 = arith.mulf %135, %134 : vector<2x6xf32>
    %140 = arith.addf %138, %139 : vector<2x6xf32>
    %141 = math.tanh %140 : vector<2x6xf32>
    %142 = arith.mulf %137, %141 : vector<2x6xf32>
    %c7 = arith.constant 7 : index
    %c0_31 = arith.constant 0 : index
    %c0_32 = arith.constant 0 : index
    %143 = vector.load %arg0[%c7, %c0_31, %c0_32] : memref<8x2x24xf32, #tpu.memory_space<vmem>>, vector<1x2x24xf32>
    %144 = vector.shape_cast %143 : vector<1x2x24xf32> to vector<2x24xf32>
    %cst_33 = arith.constant dense<0.000000e+00> : vector<2x24xf32>
    %145 = tpu.matmul %142, %0, %cst_33 {dimension_numbers = #tpu.dot_dimension_numbers<[1], [0], [0], [1], [0, 0, 1, 1], [], []>} : vector<2x6xf32>, vector<6x24xf32>, vector<2x24xf32> -> vector<2x24xf32>
    %146 = arith.addf %144, %145 : vector<2x24xf32>
    %147 = vector.extract_strided_slice %146 {offsets = [0, 0], sizes = [2, 18], strides = [1, 1]} : vector<2x24xf32> to vector<2x18xf32>
    %148 = arith.negf %147 : vector<2x18xf32>
    %149 = math.exp %148 : vector<2x18xf32>
    %cst_34 = arith.constant 1.000000e+00 : f32
    %150 = vector.broadcast %cst_34 : f32 to vector<2x18xf32>
    %151 = arith.addf %150, %149 : vector<2x18xf32>
    %152 = arith.divf %150, %151 : vector<2x18xf32>
    %153 = vector.extract_strided_slice %146 {offsets = [0, 18], sizes = [2, 6], strides = [1, 1]} : vector<2x24xf32> to vector<2x6xf32>
    %154 = math.tanh %153 : vector<2x6xf32>
    %155 = vector.extract_strided_slice %152 {offsets = [0, 0], sizes = [2, 6], strides = [1, 1]} : vector<2x18xf32> to vector<2x6xf32>
    %156 = vector.extract_strided_slice %152 {offsets = [0, 6], sizes = [2, 6], strides = [1, 1]} : vector<2x18xf32> to vector<2x6xf32>
    %157 = vector.extract_strided_slice %152 {offsets = [0, 12], sizes = [2, 6], strides = [1, 1]} : vector<2x18xf32> to vector<2x6xf32>
    %158 = arith.mulf %156, %140 : vector<2x6xf32>
    %159 = arith.mulf %155, %154 : vector<2x6xf32>
    %160 = arith.addf %158, %159 : vector<2x6xf32>
    %161 = math.tanh %160 : vector<2x6xf32>
    %162 = arith.mulf %157, %161 : vector<2x6xf32>
    %c0_35 = arith.constant 0 : index
    %c0_36 = arith.constant 0 : index
    %163 = vector.load %arg2[%c0_35, %c0_36] : memref<6x2xf32, #tpu.memory_space<vmem>>, vector<6x2xf32>
    %cst_37 = arith.constant dense<0.000000e+00> : vector<2x2xf32>
    %164 = tpu.matmul %162, %163, %cst_37 {dimension_numbers = #tpu.dot_dimension_numbers<[1], [0], [0], [1], [0, 0, 1, 1], [], []>} : vector<2x6xf32>, vector<6x2xf32>, vector<2x2xf32> -> vector<2x2xf32>
    %c0_38 = arith.constant 0 : index
    %c0_39 = arith.constant 0 : index
    %165 = vector.load %arg3[%c0_38, %c0_39] : memref<1x2xf32, #tpu.memory_space<vmem>>, vector<1x2xf32>
    %166 = vector.broadcast %165 : vector<1x2xf32> to vector<2x2xf32>
    %167 = arith.addf %164, %166 : vector<2x2xf32>
    %c0_40 = arith.constant 0 : index
    %c0_41 = arith.constant 0 : index
    %168 = vector.load %arg4[%c0_40, %c0_41] : memref<2x2xf32, #tpu.memory_space<vmem>>, vector<2x2xf32>
    tpu.vector_store %arg4[%c0_40, %c0_41], %167 {strides = array<i32>} : memref<2x2xf32, #tpu.memory_space<vmem>>, vector<2x2xf32>,
    return
  }
}

</mosaic_0001>

<llo_original>
// kernel: tpu_custom_call.1
$region0: #{tpu_custom_call.1}
  #allocation0 [shape = 'u32[]', space=smem, size = 0x4, offset = 0x4, fixed_abs, tag = 'smem constant byte address 0x4 - core index']
  #allocation1 [shape = 'u32[72,128]{1,0:T(1,128)}', space=vmem, size = 0x9000, scoped, tag = 'internal scratch']
  %s0 = inlined_call_operand.hbm [shape: f32[8,2,24], index: 0, kind: input, shape index: {}]
  %s1 = inlined_call_operand.vmem [shape: f32[6,24], index: 1, kind: input, shape index: {}]
  %s2 = inlined_call_operand.vmem [shape: f32[6,2], index: 2, kind: input, shape index: {}]
  %s3 = inlined_call_operand.vmem [shape: f32[1,2], index: 3, kind: input, shape index: {}]
  %s4 = inlined_call_operand.hbm [shape: f32[2,2], index: 4, kind: output, shape index: {}]
  %s5 = sld [smem:[#allocation0]]
  $region30: #{tpu_custom_call.1} parent=0
    _
  %s7 = ssub.s32 1, %s5
  %s8 = scalar_select 0, %s7, %s5
  $region1: #{tpu_custom_call.1} parent=0
    #allocation2 [shape = 'u8[8192]{0}', space=vmem, size = 0x2000, scoped, tag = 'input window, operand 0, single buffered']
    #allocation3 [shape = 's32[1]{0}', space=sflag, size = 0x4, scoped, tag = 'scoped memory for tpu_custom_call.1']
    #allocation4 [shape = 's32[1]{0}', space=sflag, size = 0x4, scoped, tag = 'scoped memory for tpu_custom_call.1']
    #allocation5 [shape = 'u8[1024]{0}', space=vmem, size = 0x400, scoped, tag = 'output window, operand 0, single buffered']
    %9 = vsyncpa [#allocation3], 0
    %10 = vsyncpa [#allocation4], 0
    // Predicated region
    $region2: #{tpu_custom_call.1} parent=1 // pred_check
      _
    $region3: #{tpu_custom_call.1} parent=1 // pred_check_branch
      %12 = sbr.rel (0) target = $region5
    $region4: #{tpu_custom_call.1} parent=1 // pred_region
      %14 = vsyncadd [#allocation3], 0
      %s15 = sshll.u32 %s0, 4
      %s16 = int_to_ptr.hbm [resolvable:$true] %s15
      %s17 = sshll.u32 [#allocation2], 4
      %s18 = int_to_ptr.vmem [resolvable:$true] %s17
      %23 = dma.hbm_to_vmem [thread:$0]  %s16, 256, %s18, [#allocation3], 32, 32, 2
    $region5: #{tpu_custom_call.1} parent=1 // pred_fallthru
      _
    // Predicated region
    $region6: #{tpu_custom_call.1} parent=1 // pred_check
      _
    $region7: #{tpu_custom_call.1} parent=1 // pred_check_branch
      %25 = sbr.rel (0) target = $region9
    $region8: #{tpu_custom_call.1} parent=1 // pred_region
      _
    $region9: #{tpu_custom_call.1} parent=1 // pred_fallthru
      _
    // Predicated region
    $region10: #{tpu_custom_call.1} parent=1 // pred_check
      _
    $region11: #{tpu_custom_call.1} parent=1 // pred_check_branch
      %27 = sbr.rel (0) target = $region13
    $region12: #{tpu_custom_call.1} parent=1 // pred_region
      _
    $region13: #{tpu_custom_call.1} parent=1 // pred_fallthru
      _
    // Predicated region
    $region14: #{tpu_custom_call.1} parent=1 // pred_check
      _
    $region15: #{tpu_custom_call.1} parent=1 // pred_check_branch
      %29 = sbr.rel (0) target = $region17
    $region16: #{tpu_custom_call.1} parent=1 // pred_region
      _
    $region17: #{tpu_custom_call.1} parent=1 // pred_fallthru
      _
    // Predicated region
    $region18: #{tpu_custom_call.1} parent=1 // pred_check
      _
    $region19: #{tpu_custom_call.1} parent=1 // pred_check_branch
      %31 = sbr.rel (0) target = $region21
    $region20: #{tpu_custom_call.1} parent=1 // pred_region
      %33 = dma.done [#allocation3], 256
    $region21: #{tpu_custom_call.1} parent=1 // pred_fallthru
      _
    %v34 = vld [vmem:[%s1] sm:$0x3f]
    %v35 = vld [vmem:[#allocation2] sm:$0x3]
    %vm36 = vcmask 48128
    %v38 = vsel %vm36, 0.0, 0
    %vm40 = vcmask 1045504
    %v42 = vsel %vm40, %v34, 0
    %44 = vmatpush.msra.mxu0 0.0
    %45 = vmatpush.msra.mxu0 0.0
    %46 = vmatpush.msra.mxu0 0.0
    %47 = vmatpush.msra.mxu0 0.0
    %48 = vmatpush.msra.mxu0 0.0
    %49 = vmatpush.msra.mxu0 0.0
    %50 = vmatpush.msra.mxu0 0.0
    %51 = vmatpush.msra.mxu0 0.0
    %52 = vmatpush.msra.mxu0 0.0
    %53 = vmatpush.msra.mxu0 0.0
    %54 = vmatpush.msra.mxu0 0.0
    %55 = vmatpush.msra.mxu0 0.0
    %56 = vmatpush.msra.mxu0 0.0
    %57 = vmatpush.msra.mxu0 0.0
    %58 = vmatpush.msra.mxu0 0.0
    %59 = vmatpush.msra.mxu0 %v42
    %60 = vmatmul.f32.gmra.mxu0 %v38
    %v61 = vpop.f32.mrf.mxu0
    %v62 = vadd.f32 0.0, %v61
    %63 = vdwg.mxu0
    %v64 = vadd.f32 %v35, %v62
    %v65 = vxor.u32 %v64, 2147483648
    %v66 = vmul.f32 %v65, 1.442695
    %v67 = vpow.pop %v66
    %v68 = vadd.f32 %v67, 1.0
    %v69 = vrcp.pop %v68
    %v70 = vmul.f32 %v68, %v69
    %v71 = vsub.f32 1.0, %v70
    %v72 = vmul.f32 %v69, %v71
    %v73 = vadd.f32 %v69, %v72
    %vm74 = vweird.f32 %v68
    %vm75 = vweird.f32 %v69
    %vm76 = vmor %vm74, %vm75
    %v77 = vsel %vm76, %v69, %v73
    %v78 = vand.u32 2147483647, %v68
    %vm79 = vcmp.eq.f32.partialorder %v78, 8.507059e+37
    %v80 = vand.u32 %v68, 2147483648
    %v81 = vor.u32 1.1754944e-38, %v80
    %v82 = vsel %vm79, %v81, %v77
    %v83 = vmul.f32 1.0, %v82
    %v84 = vtanh.pop %v64
    %v85 = vmul.f32 %v83, 0.0
    %87 = vrot.lane.b32.xlu0 %v84, 110
    %v88 = vpop.permute.xlu0 %87
    %v90 = vmul.f32 %v83, %v88
    %92 = vrot.lane.b32.xlu0 %v90, 6
    %v93 = vpop.permute.xlu0 %92
    %v95 = vadd.f32 %v85, %v93
    %v96 = vtanh.pop %v95
    %98 = vrot.lane.b32.xlu0 %v96, 6
    %v99 = vpop.permute.xlu0 %98
    %v101 = vmul.f32 %v83, %v99
    %s102 = scalar_lea.vmem [#allocation2], 2
    %v103 = vld [vmem:[%s102] sm:$0x3]
    %105 = vrot.lane.b32.xlu0 %v101, 116
    %v106 = vpop.permute.xlu0 %105
    %v107 = vsel %vm36, %v106, 0
    %109 = vmatpush.msra.mxu0 0.0
    %110 = vmatpush.msra.mxu0 0.0
    %111 = vmatpush.msra.mxu0 0.0
    %112 = vmatpush.msra.mxu0 0.0
    %113 = vmatpush.msra.mxu0 0.0
    %114 = vmatpush.msra.mxu0 0.0
    %115 = vmatpush.msra.mxu0 0.0
    %116 = vmatpush.msra.mxu0 0.0
    %117 = vmatpush.msra.mxu0 0.0
    %118 = vmatpush.msra.mxu0 0.0
    %119 = vmatpush.msra.mxu0 0.0
    %120 = vmatpush.msra.mxu0 0.0
    %121 = vmatpush.msra.mxu0 0.0
    %122 = vmatpush.msra.mxu0 0.0
    %123 = vmatpush.msra.mxu0 0.0
    %124 = vmatpush.msra.mxu0 %v42
    %125 = vmatmul.f32.gmra.mxu0 %v107
    %v126 = vpop.f32.mrf.mxu0
    %v127 = vadd.f32 0.0, %v126
    %128 = vdwg.mxu0
    %v129 = vadd.f32 %v103, %v127
    %v130 = vxor.u32 %v129, 2147483648
    %v131 = vmul.f32 %v130, 1.442695
    %v132 = vpow.pop %v131
    %v133 = vadd.f32 %v132, 1.0
    %v134 = vrcp.pop %v133
    %v135 = vmul.f32 %v133, %v134
    %v136 = vsub.f32 1.0, %v135
    %v137 = vmul.f32 %v134, %v136
    %v138 = vadd.f32 %v134, %v137
    %vm139 = vweird.f32 %v133
    %vm140 = vweird.f32 %v134
    %vm141 = vmor %vm139, %vm140
    %v142 = vsel %vm141, %v134, %v138
    %v143 = vand.u32 2147483647, %v133
    %vm144 = vcmp.eq.f32.partialorder %v143, 8.507059e+37
    %v145 = vand.u32 %v133, 2147483648
    %v146 = vor.u32 1.1754944e-38, %v145
    %v147 = vsel %vm144, %v146, %v142
    %v148 = vmul.f32 1.0, %v147
    %v149 = vtanh.pop %v129
    %v150 = vmul.f32 %v148, %v95
    %152 = vrot.lane.b32.xlu0 %v149, 110
    %v153 = vpop.permute.xlu0 %152
    %v155 = vmul.f32 %v148, %v153
    %157 = vrot.lane.b32.xlu0 %v155, 6
    %v158 = vpop.permute.xlu0 %157
    %v160 = vadd.f32 %v150, %v158
    %v161 = vtanh.pop %v160
    %163 = vrot.lane.b32.xlu0 %v161, 6
    %v164 = vpop.permute.xlu0 %163
    %v166 = vmul.f32 %v148, %v164
    %s167 = scalar_lea.vmem [#allocation2], 4
    %v168 = vld [vmem:[%s167] sm:$0x3]
    %170 = vrot.lane.b32.xlu0 %v166, 116
    %v171 = vpop.permute.xlu0 %170
    %v172 = vsel %vm36, %v171, 0
    %174 = vmatpush.msra.mxu0 0.0
    %175 = vmatpush.msra.mxu0 0.0
    %176 = vmatpush.msra.mxu0 0.0
    %177 = vmatpush.msra.mxu0 0.0
    %178 = vmatpush.msra.mxu0 0.0
    %179 = vmatpush.msra.mxu0 0.0
    %180 = vmatpush.msra.mxu0 0.0
    %181 = vmatpush.msra.mxu0 0.0
    %182 = vmatpush.msra.mxu0 0.0
    %183 = vmatpush.msra.mxu0 0.0
    %184 = vmatpush.msra.mxu0 0.0
    %185 = vmatpush.msra.mxu0 0.0
    %186 = vmatpush.msra.mxu0 0.0
    %187 = vmatpush.msra.mxu0 0.0
    %188 = vmatpush.msra.mxu0 0.0
    %189 = vmatpush.msra.mxu0 %v42
    %190 = vmatmul.f32.gmra.mxu0 %v172
    %v191 = vpop.f32.mrf.mxu0
    %v192 = vadd.f32 0.0, %v191
    %193 = vdwg.mxu0
    %v194 = vadd.f32 %v168, %v192
    %v195 = vxor.u32 %v194, 2147483648
    %v196 = vmul.f32 %v195, 1.442695
    %v197 = vpow.pop %v196
    %v198 = vadd.f32 %v197, 1.0
    %v199 = vrcp.pop %v198
    %v200 = vmul.f32 %v198, %v199
    %v201 = vsub.f32 1.0, %v200
    %v202 = vmul.f32 %v199, %v201
    %v203 = vadd.f32 %v199, %v202
    %vm204 = vweird.f32 %v198
    %vm205 = vweird.f32 %v199
    %vm206 = vmor %vm204, %vm205
    %v207 = vsel %vm206, %v199, %v203
    %v208 = vand.u32 2147483647, %v198
    %vm209 = vcmp.eq.f32.partialorder %v208, 8.507059e+37
    %v210 = vand.u32 %v198, 2147483648
    %v211 = vor.u32 1.1754944e-38, %v210
    %v212 = vsel %vm209, %v211, %v207
    %v213 = vmul.f32 1.0, %v212
    %v214 = vtanh.pop %v194
    %v215 = vmul.f32 %v213, %v160
    %217 = vrot.lane.b32.xlu0 %v214, 110
    %v218 = vpop.permute.xlu0 %217
    %v220 = vmul.f32 %v213, %v218
    %222 = vrot.lane.b32.xlu0 %v220, 6
    %v223 = vpop.permute.xlu0 %222
    %v225 = vadd.f32 %v215, %v223
    %v226 = vtanh.pop %v225
    %228 = vrot.lane.b32.xlu0 %v226, 6
    %v229 = vpop.permute.xlu0 %228
    %v231 = vmul.f32 %v213, %v229
    %s232 = scalar_lea.vmem [#allocation2], 6
    %v233 = vld [vmem:[%s232] sm:$0x3]
    %235 = vrot.lane.b32.xlu0 %v231, 116
    %v236 = vpop.permute.xlu0 %235
    %v237 = vsel %vm36, %v236, 0
    %239 = vmatpush.msra.mxu0 0.0
    %240 = vmatpush.msra.mxu0 0.0
    %241 = vmatpush.msra.mxu0 0.0
    %242 = vmatpush.msra.mxu0 0.0
    %243 = vmatpush.msra.mxu0 0.0
    %244 = vmatpush.msra.mxu0 0.0
    %245 = vmatpush.msra.mxu0 0.0
    %246 = vmatpush.msra.mxu0 0.0
    %247 = vmatpush.msra.mxu0 0.0
    %248 = vmatpush.msra.mxu0 0.0
    %249 = vmatpush.msra.mxu0 0.0
    %250 = vmatpush.msra.mxu0 0.0
    %251 = vmatpush.msra.mxu0 0.0
    %252 = vmatpush.msra.mxu0 0.0
    %253 = vmatpush.msra.mxu0 0.0
    %254 = vmatpush.msra.mxu0 %v42
    %255 = vmatmul.f32.gmra.mxu0 %v237
    %v256 = vpop.f32.mrf.mxu0
    %v257 = vadd.f32 0.0, %v256
    %258 = vdwg.mxu0
    %v259 = vadd.f32 %v233, %v257
    %v260 = vxor.u32 %v259, 2147483648
    %v261 = vmul.f32 %v260, 1.442695
    %v262 = vpow.pop %v261
    %v263 = vadd.f32 %v262, 1.0
    %v264 = vrcp.pop %v263
    %v265 = vmul.f32 %v263, %v264
    %v266 = vsub.f32 1.0, %v265
    %v267 = vmul.f32 %v264, %v266
    %v268 = vadd.f32 %v264, %v267
    %vm269 = vweird.f32 %v263
    %vm270 = vweird.f32 %v264
    %vm271 = vmor %vm269, %vm270
    %v272 = vsel %vm271, %v264, %v268
    %v273 = vand.u32 2147483647, %v263
    %vm274 = vcmp.eq.f32.partialorder %v273, 8.507059e+37
    %v275 = vand.u32 %v263, 2147483648
    %v276 = vor.u32 1.1754944e-38, %v275
    %v277 = vsel %vm274, %v276, %v272
    %v278 = vmul.f32 1.0, %v277
    %v279 = vtanh.pop %v259
    %v280 = vmul.f32 %v278, %v225
    %282 = vrot.lane.b32.xlu0 %v279, 110
    %v283 = vpop.permute.xlu0 %282
    %v285 = vmul.f32 %v278, %v283
    %287 = vrot.lane.b32.xlu0 %v285, 6
    %v288 = vpop.permute.xlu0 %287
    %v290 = vadd.f32 %v280, %v288
    %v291 = vtanh.pop %v290
    %293 = vrot.lane.b32.xlu0 %v291, 6
    %v294 = vpop.permute.xlu0 %293
    %v296 = vmul.f32 %v278, %v294
    %s297 = scalar_lea.vmem [#allocation2], 8
    %v298 = vld [vmem:[%s297] sm:$0x3]
    %300 = vrot.lane.b32.xlu0 %v296, 116
    %v301 = vpop.permute.xlu0 %300
    %v302 = vsel %vm36, %v301, 0
    %304 = vmatpush.msra.mxu0 0.0
    %305 = vmatpush.msra.mxu0 0.0
    %306 = vmatpush.msra.mxu0 0.0
    %307 = vmatpush.msra.mxu0 0.0
    %308 = vmatpush.msra.mxu0 0.0
    %309 = vmatpush.msra.mxu0 0.0
    %310 = vmatpush.msra.mxu0 0.0
    %311 = vmatpush.msra.mxu0 0.0
    %312 = vmatpush.msra.mxu0 0.0
    %313 = vmatpush.msra.mxu0 0.0
    %314 = vmatpush.msra.mxu0 0.0
    %315 = vmatpush.msra.mxu0 0.0
    %316 = vmatpush.msra.mxu0 0.0
    %317 = vmatpush.msra.mxu0 0.0
    %318 = vmatpush.msra.mxu0 0.0
    %319 = vmatpush.msra.mxu0 %v42
    %320 = vmatmul.f32.gmra.mxu0 %v302
    %v321 = vpop.f32.mrf.mxu0
    %v322 = vadd.f32 0.0, %v321
    %323 = vdwg.mxu0
    %v324 = vadd.f32 %v298, %v322
    %v325 = vxor.u32 %v324, 2147483648
    %v326 = vmul.f32 %v325, 1.442695
    %v327 = vpow.pop %v326
    %v328 = vadd.f32 %v327, 1.0
    %v329 = vrcp.pop %v328
    %v330 = vmul.f32 %v328, %v329
    %v331 = vsub.f32 1.0, %v330
    %v332 = vmul.f32 %v329, %v331
    %v333 = vadd.f32 %v329, %v332
    %vm334 = vweird.f32 %v328
    %vm335 = vweird.f32 %v329
    %vm336 = vmor %vm334, %vm335
    %v337 = vsel %vm336, %v329, %v333
    %v338 = vand.u32 2147483647, %v328
    %vm339 = vcmp.eq.f32.partialorder %v338, 8.507059e+37
    %v340 = vand.u32 %v328, 2147483648
    %v341 = vor.u32 1.1754944e-38, %v340
    %v342 = vsel %vm339, %v341, %v337
    %v343 = vmul.f32 1.0, %v342
    %v344 = vtanh.pop %v324
    %v345 = vmul.f32 %v343, %v290
    %347 = vrot.lane.b32.xlu0 %v344, 110
    %v348 = vpop.permute.xlu0 %347
    %v350 = vmul.f32 %v343, %v348
    %352 = vrot.lane.b32.xlu0 %v350, 6
    %v353 = vpop.permute.xlu0 %352
    %v355 = vadd.f32 %v345, %v353
    %v356 = vtanh.pop %v355
    %358 = vrot.lane.b32.xlu0 %v356, 6
    %v359 = vpop.permute.xlu0 %358
    %v361 = vmul.f32 %v343, %v359
    %s362 = scalar_lea.vmem [#allocation2], 10
    %v363 = vld [vmem:[%s362] sm:$0x3]
    %365 = vrot.lane.b32.xlu0 %v361, 116
    %v366 = vpop.permute.xlu0 %365
    %v367 = vsel %vm36, %v366, 0
    %369 = vmatpush.msra.mxu0 0.0
    %370 = vmatpush.msra.mxu0 0.0
    %371 = vmatpush.msra.mxu0 0.0
    %372 = vmatpush.msra.mxu0 0.0
    %373 = vmatpush.msra.mxu0 0.0
    %374 = vmatpush.msra.mxu0 0.0
    %375 = vmatpush.msra.mxu0 0.0
    %376 = vmatpush.msra.mxu0 0.0
    %377 = vmatpush.msra.mxu0 0.0
    %378 = vmatpush.msra.mxu0 0.0
    %379 = vmatpush.msra.mxu0 0.0
    %380 = vmatpush.msra.mxu0 0.0
    %381 = vmatpush.msra.mxu0 0.0
    %382 = vmatpush.msra.mxu0 0.0
    %383 = vmatpush.msra.mxu0 0.0
    %384 = vmatpush.msra.mxu0 %v42
    %385 = vmatmul.f32.gmra.mxu0 %v367
    %v386 = vpop.f32.mrf.mxu0
    %v387 = vadd.f32 0.0, %v386
    %388 = vdwg.mxu0
    %v389 = vadd.f32 %v363, %v387
    %v390 = vxor.u32 %v389, 2147483648
    %v391 = vmul.f32 %v390, 1.442695
    %v392 = vpow.pop %v391
    %v393 = vadd.f32 %v392, 1.0
    %v394 = vrcp.pop %v393
    %v395 = vmul.f32 %v393, %v394
    %v396 = vsub.f32 1.0, %v395
    %v397 = vmul.f32 %v394, %v396
    %v398 = vadd.f32 %v394, %v397
    %vm399 = vweird.f32 %v393
    %vm400 = vweird.f32 %v394
    %vm401 = vmor %vm399, %vm400
    %v402 = vsel %vm401, %v394, %v398
    %v403 = vand.u32 2147483647, %v393
    %vm404 = vcmp.eq.f32.partialorder %v403, 8.507059e+37
    %v405 = vand.u32 %v393, 2147483648
    %v406 = vor.u32 1.1754944e-38, %v405
    %v407 = vsel %vm404, %v406, %v402
    %v408 = vmul.f32 1.0, %v407
    %v409 = vtanh.pop %v389
    %v410 = vmul.f32 %v408, %v355
    %412 = vrot.lane.b32.xlu0 %v409, 110
    %v413 = vpop.permute.xlu0 %412
    %v415 = vmul.f32 %v408, %v413
    %417 = vrot.lane.b32.xlu0 %v415, 6
    %v418 = vpop.permute.xlu0 %417
    %v420 = vadd.f32 %v410, %v418
    %v421 = vtanh.pop %v420
    %423 = vrot.lane.b32.xlu0 %v421, 6
    %v424 = vpop.permute.xlu0 %423
    %v426 = vmul.f32 %v408, %v424
    %s427 = scalar_lea.vmem [#allocation2], 12
    %v428 = vld [vmem:[%s427] sm:$0x3]
    %430 = vrot.lane.b32.xlu0 %v426, 116
    %v431 = vpop.permute.xlu0 %430
    %v432 = vsel %vm36, %v431, 0
    %434 = vmatpush.msra.mxu0 0.0
    %435 = vmatpush.msra.mxu0 0.0
    %436 = vmatpush.msra.mxu0 0.0
    %437 = vmatpush.msra.mxu0 0.0
    %438 = vmatpush.msra.mxu0 0.0
    %439 = vmatpush.msra.mxu0 0.0
    %440 = vmatpush.msra.mxu0 0.0
    %441 = vmatpush.msra.mxu0 0.0
    %442 = vmatpush.msra.mxu0 0.0
    %443 = vmatpush.msra.mxu0 0.0
    %444 = vmatpush.msra.mxu0 0.0
    %445 = vmatpush.msra.mxu0 0.0
    %446 = vmatpush.msra.mxu0 0.0
    %447 = vmatpush.msra.mxu0 0.0
    %448 = vmatpush.msra.mxu0 0.0
    %449 = vmatpush.msra.mxu0 %v42
    %450 = vmatmul.f32.gmra.mxu0 %v432
    %v451 = vpop.f32.mrf.mxu0
    %v452 = vadd.f32 0.0, %v451
    %453 = vdwg.mxu0
    %v454 = vadd.f32 %v428, %v452
    %v455 = vxor.u32 %v454, 2147483648
    %v456 = vmul.f32 %v455, 1.442695
    %v457 = vpow.pop %v456
    %v458 = vadd.f32 %v457, 1.0
    %v459 = vrcp.pop %v458
    %v460 = vmul.f32 %v458, %v459
    %v461 = vsub.f32 1.0, %v460
    %v462 = vmul.f32 %v459, %v461
    %v463 = vadd.f32 %v459, %v462
    %vm464 = vweird.f32 %v458
    %vm465 = vweird.f32 %v459
    %vm466 = vmor %vm464, %vm465
    %v467 = vsel %vm466, %v459, %v463
    %v468 = vand.u32 2147483647, %v458
    %vm469 = vcmp.eq.f32.partialorder %v468, 8.507059e+37
    %v470 = vand.u32 %v458, 2147483648
    %v471 = vor.u32 1.1754944e-38, %v470
    %v472 = vsel %vm469, %v471, %v467
    %v473 = vmul.f32 1.0, %v472
    %v474 = vtanh.pop %v454
    %v475 = vmul.f32 %v473, %v420
    %477 = vrot.lane.b32.xlu0 %v474, 110
    %v478 = vpop.permute.xlu0 %477
    %v480 = vmul.f32 %v473, %v478
    %482 = vrot.lane.b32.xlu0 %v480, 6
    %v483 = vpop.permute.xlu0 %482
    %v485 = vadd.f32 %v475, %v483
    %v486 = vtanh.pop %v485
    %488 = vrot.lane.b32.xlu0 %v486, 6
    %v489 = vpop.permute.xlu0 %488
    %v491 = vmul.f32 %v473, %v489
    %s492 = scalar_lea.vmem [#allocation2], 14
    %v493 = vld [vmem:[%s492] sm:$0x3]
    %495 = vrot.lane.b32.xlu0 %v491, 116
    %v496 = vpop.permute.xlu0 %495
    %v497 = vsel %vm36, %v496, 0
    %499 = vmatpush.msra.mxu0 0.0
    %500 = vmatpush.msra.mxu0 0.0
    %501 = vmatpush.msra.mxu0 0.0
    %502 = vmatpush.msra.mxu0 0.0
    %503 = vmatpush.msra.mxu0 0.0
    %504 = vmatpush.msra.mxu0 0.0
    %505 = vmatpush.msra.mxu0 0.0
    %506 = vmatpush.msra.mxu0 0.0
    %507 = vmatpush.msra.mxu0 0.0
    %508 = vmatpush.msra.mxu0 0.0
    %509 = vmatpush.msra.mxu0 0.0
    %510 = vmatpush.msra.mxu0 0.0
    %511 = vmatpush.msra.mxu0 0.0
    %512 = vmatpush.msra.mxu0 0.0
    %513 = vmatpush.msra.mxu0 0.0
    %514 = vmatpush.msra.mxu0 %v42
    %515 = vmatmul.f32.gmra.mxu0 %v497
    %v516 = vpop.f32.mrf.mxu0
    %v517 = vadd.f32 0.0, %v516
    %518 = vdwg.mxu0
    %v519 = vadd.f32 %v493, %v517
    %v520 = vxor.u32 %v519, 2147483648
    %v521 = vmul.f32 %v520, 1.442695
    %v522 = vpow.pop %v521
    %v523 = vadd.f32 %v522, 1.0
    %v524 = vrcp.pop %v523
    %v525 = vmul.f32 %v523, %v524
    %v526 = vsub.f32 1.0, %v525
    %v527 = vmul.f32 %v524, %v526
    %v528 = vadd.f32 %v524, %v527
    %vm529 = vweird.f32 %v523
    %vm530 = vweird.f32 %v524
    %vm531 = vmor %vm529, %vm530
    %v532 = vsel %vm531, %v524, %v528
    %v533 = vand.u32 2147483647, %v523
    %vm534 = vcmp.eq.f32.partialorder %v533, 8.507059e+37
    %v535 = vand.u32 %v523, 2147483648
    %v536 = vor.u32 1.1754944e-38, %v535
    %v537 = vsel %vm534, %v536, %v532
    %v538 = vmul.f32 1.0, %v537
    %v539 = vtanh.pop %v519
    %v540 = vmul.f32 %v538, %v485
    %542 = vrot.lane.b32.xlu0 %v539, 110
    %v543 = vpop.permute.xlu0 %542
    %v545 = vmul.f32 %v538, %v543
    %547 = vrot.lane.b32.xlu0 %v545, 6
    %v548 = vpop.permute.xlu0 %547
    %v550 = vadd.f32 %v540, %v548
    %v551 = vtanh.pop %v550
    %553 = vrot.lane.b32.xlu0 %v551, 6
    %v554 = vpop.permute.xlu0 %553
    %v556 = vmul.f32 %v538, %v554
    %v557 = vld [vmem:[%s2] sm:$0x3f]
    %v558 = vld [vmem:[%s3] sm:$0x1]
    %v560 = vperm.slane %v558, 0
    %563 = vrot.lane.b32.xlu0 %v556, 116
    %v564 = vpop.permute.xlu0 %563
    %v565 = vsel %vm36, %v564, 0
    %v568 = vsel %vm40, %v557, 0
    %570 = vmatpush.msra.mxu0 0.0
    %571 = vmatpush.msra.mxu0 0.0
    %572 = vmatpush.msra.mxu0 0.0
    %573 = vmatpush.msra.mxu0 0.0
    %574 = vmatpush.msra.mxu0 0.0
    %575 = vmatpush.msra.mxu0 0.0
    %576 = vmatpush.msra.mxu0 0.0
    %577 = vmatpush.msra.mxu0 0.0
    %578 = vmatpush.msra.mxu0 0.0
    %579 = vmatpush.msra.mxu0 0.0
    %580 = vmatpush.msra.mxu0 0.0
    %581 = vmatpush.msra.mxu0 0.0
    %582 = vmatpush.msra.mxu0 0.0
    %583 = vmatpush.msra.mxu0 0.0
    %584 = vmatpush.msra.mxu0 0.0
    %585 = vmatpush.msra.mxu0 %v568
    %586 = vmatmul.f32.gmra.mxu0 %v565
    %v587 = vpop.f32.mrf.mxu0
    %v588 = vadd.f32 %v560, %v587
    %589 = vdwg.mxu0
    %vm590 = vcmask 9216
    %591 = vst.msk [vmem:[#allocation5] sm:$0x3] %vm590, %v588
    // Predicated region
    $region22: #{tpu_custom_call.1} parent=1 // pred_check
      _
    $region23: #{tpu_custom_call.1} parent=1 // pred_check_branch
      %593 = sbr.rel (0) target = $region25
    $region24: #{tpu_custom_call.1} parent=1 // pred_region
      %595 = vsyncadd [#allocation4], 0
      %s597 = sshll.u32 [#allocation5], 4
      %s598 = int_to_ptr.vmem [resolvable:$true] %s597
      %s599 = sshll.u32 %s4, 4
      %s600 = int_to_ptr.hbm [resolvable:$true] %s599
      %602 = dma.vmem_to_hbm [thread:$0]  %s598, 32, %s600, [#allocation4]
    $region25: #{tpu_custom_call.1} parent=1 // pred_fallthru
      _
    // Predicated region
    $region26: #{tpu_custom_call.1} parent=1 // pred_check
      _
    $region27: #{tpu_custom_call.1} parent=1 // pred_check_branch
      %604 = sbr.rel (0) target = $region29
    $region28: #{tpu_custom_call.1} parent=1 // pred_region
      %606 = dma.done [#allocation4], 32
    $region29: #{tpu_custom_call.1} parent=1 // pred_fallthru
      _
    %607 = vsyncpa [#allocation3], 1
    %608 = vsyncpa [#allocation4], 1

</llo_original>
